<compile_context>
chip_gen: v7x
topology: tpu7x:2x2x1
jax: 0.10.0
libtpu: 0.0.40
codegen_flags: <defaults>
</compile_context>

<pallas_src>
import functools

import jax
import jax.numpy as jnp
from jax.experimental import pallas as pl
from jax.experimental.pallas import tpu as pltpu


def _make_divisible(v, divisor=8, min_value=None):
    if min_value is None:
        min_value = divisor
    new_v = max(min_value, int(v + divisor / 2) // divisor * divisor)
    if new_v < 0.9 * v:
        new_v += divisor
    return new_v


def _hswish(x):
    return x * (jnp.clip(x + 3.0, 0.0, 6.0) * (1.0 / 6.0))


def _lc_kernel(x_ref, mask_ref, se_w1_ref, se_b1_ref, se_w2_ref, se_b2_ref,
               dw_ref, bn1_b_ref, pw_ref, bn2_s_ref, bn2_b_ref, o_ref,
               *, W, K, P, HW):
    # x_ref block: (N, HW) with N = B_TILE*C rows (batch*channel on sublanes)
    # and the flattened spatial H*W on lanes (lane-dense).
    x = x_ref[...]

    # ---------------- SELayer (VPU): global avg-pool + two tiny FCs; the
    # block-diagonal weights handle all B_TILE images of the block at once.
    pooled = jnp.sum(x, axis=1, keepdims=True) * (1.0 / float(HW))      # (N, 1)
    h = jnp.sum(se_w1_ref[...] * pooled, axis=0, keepdims=True) + se_b1_ref[...]
    h = jnp.maximum(h, 0.0)                                             # (1, B_TILE*hid)
    g = jnp.sum(se_w2_ref[...] * h, axis=1, keepdims=True) + se_b2_ref[...]
    gate = jnp.clip(g + 3.0, 0.0, 6.0) * (1.0 / 6.0)                    # (N, 1)

    # SE gate (per row) and BN1 scale (folded host-side into dw_ref) are
    # per-channel multiplicative, so fold them into the depthwise weights.
    w_eff = dw_ref[...] * gate                                          # (N, K*K)

    # ---------------- depthwise KxK conv (stride-1 "same") as K*K rolled FMAs.
    # Each tap is a lane rotation (XLU) of x; a precomputed mask zeroes the
    # positions whose source pixel lies outside the image (roll wraps them).
    acc = jnp.zeros(x.shape, jnp.float32)
    for kh in range(K):
        for kw in range(K):
            t = kh * K + kw
            off = (kh - P) * W + (kw - P)
            if off == 0:
                # center tap: no shift needed and every position is valid.
                contrib = x * w_eff[:, t:t + 1]
            else:
                patch = pltpu.roll(x, shift=(-off) % HW, axis=1)
                contrib = patch * mask_ref[t] * w_eff[:, t:t + 1]
            acc = acc + contrib

    # ---------------- BN1 bias (scale already in w_eff) + hard-swish
    y = _hswish(acc + bn1_b_ref[...])                                   # (N, HW)

    # ---------------- pointwise 1x1 conv via block-diagonal weight: one
    # lane-dense MXU matmul per block, then BN2 + hard-swish.
    z = jnp.dot(pw_ref[...], y, preferred_element_type=jnp.float32)     # (M, HW)
    z = z * bn2_s_ref[...] + bn2_b_ref[...]
    o_ref[...] = _hswish(z)


def _choose_batch_tile(B, C, Co, max_tile=16):
    """Images per block: make B_TILE*C and B_TILE*Co multiples of 8 (full
    sublane tiles, legal sub-array blocks). Fallback: the whole batch in one
    block (block == full array dims is always a legal BlockSpec)."""
    for d in range(min(B, max_tile), 0, -1):
        if B % d == 0 and (d * C) % 8 == 0 and (d * Co) % 8 == 0:
            return d
    return B


def lc_module_forward(x_nchw, params, kernel_size, stride):
    """Pallas implementation of LCModule.forward (use_se=True). NCHW in/out."""
    assert stride in (1, 2)
    x = x_nchw.astype(jnp.float32)
    B, C, H, W = x.shape
    K, S = kernel_size, stride
    P = (K - 1) // 2
    HW = H * W
    Co = params["pw_w"].shape[0]

    B_TILE = _choose_batch_tile(B, C, Co)
    N = B_TILE * C            # activation rows per block
    M = B_TILE * Co           # output rows per block
    grid = (B // B_TILE,)

    # NCHW -> (B*C, H*W): contiguous reshape, no transpose, no host-side pad.
    x_flat = x.reshape(B * C, HW)

    # Per-block (replicated / block-diagonal) parameters, built host-side once.
    dw_rep = jnp.tile(params["dw_w"] * params["bn1_s"], (B_TILE, 1))     # (N, K*K)
    bn1_b_rep = jnp.tile(params["bn1_b"], (B_TILE, 1))                   # (N, 1)
    bn2_s_rep = jnp.tile(params["bn2_s"], (B_TILE, 1))                   # (M, 1)
    bn2_b_rep = jnp.tile(params["bn2_b"], (B_TILE, 1))                   # (M, 1)

    eye = jnp.eye(B_TILE, dtype=jnp.float32)
    se_w1_blk = jnp.kron(eye, params["se_w1"])                           # (N, B_TILE*hid)
    se_b1_rep = jnp.tile(params["se_b1"], (1, B_TILE))                   # (1, B_TILE*hid)
    se_w2_blk = jnp.kron(eye, params["se_w2t"])                          # (N, B_TILE*hid)
    se_b2_rep = jnp.tile(params["se_b2"], (B_TILE, 1))                   # (N, 1)
    pw_blk = jnp.kron(eye, params["pw_w"])                               # (M, N)

    # Per-tap validity masks over flattened spatial positions, pre-broadcast
    # across the N sublane rows (no in-kernel broadcast on the mask operand).
    pos = jnp.arange(HW, dtype=jnp.int32)
    row, col = pos // W, pos % W
    masks = []
    for kh in range(K):
        for kw in range(K):
            dh, dww = kh - P, kw - P
            ok = ((row + dh >= 0) & (row + dh < H) &
                  (col + dww >= 0) & (col + dww < W))
            masks.append(ok.astype(jnp.float32))
    tap_mask = jnp.broadcast_to(jnp.stack(masks, 0)[:, None, :], (K * K, N, HW))

    kernel = functools.partial(_lc_kernel, W=W, K=K, P=P, HW=HW)

    def fullspec(a):
        nd = a.ndim
        return pl.BlockSpec(a.shape, lambda i, _nd=nd: (0,) * _nd)

    grid_spec = pltpu.PrefetchScalarGridSpec(
        num_scalar_prefetch=0,
        grid=grid,
        in_specs=[
            pl.BlockSpec((N, HW), lambda i: (i, 0)),
            fullspec(tap_mask),
            fullspec(se_w1_blk), fullspec(se_b1_rep),
            fullspec(se_w2_blk), fullspec(se_b2_rep),
            fullspec(dw_rep), fullspec(bn1_b_rep),
            fullspec(pw_blk), fullspec(bn2_s_rep), fullspec(bn2_b_rep),
        ],
        out_specs=pl.BlockSpec((M, HW), lambda i: (i, 0)),
    )

    out_flat = pl.pallas_call(
        kernel,
        out_shape=jax.ShapeDtypeStruct((B * Co, HW), jnp.float32),
        grid_spec=grid_spec,
        compiler_params=pltpu.CompilerParams(
            dimension_semantics=("parallel",)),
    )(x_flat, tap_mask, se_w1_blk, se_b1_rep, se_w2_blk, se_b2_rep,
      dw_rep, bn1_b_rep, pw_blk, bn2_s_rep, bn2_b_rep)

    out = out_flat.reshape(B, Co, H, W)
    if S > 1:
        # TODO(synk): stride>1 computes the full-resolution map in-kernel and
        # subsamples here (identical math since the pointwise conv is 1x1); a
        # dedicated strided-tap kernel path would avoid the ~S^2 extra work.
        out = out[:, :, ::S, ::S]
    return out


def init_params(key, inp, oup, kernel_size, reduction=4, eps=1e-5):
    """Deterministic synthetic parameters matching LCModule(inp, oup, k, s)."""
    hid = _make_divisible(inp // reduction)
    ks = jax.random.split(key, 10)
    # SE fc weights stored channel-major for the (C, hid) broadcast layout:
    # se_w1[c, j]  = Conv2d(inp->hid).weight[j, c]
    # se_w2t[c, j] = Conv2d(hid->inp).weight[c, j]
    se_w1 = 0.1 * jax.random.normal(ks[0], (inp, hid), jnp.float32)
    se_b1 = 0.1 * jax.random.normal(ks[1], (1, hid), jnp.float32)
    se_w2t = 0.1 * jax.random.normal(ks[2], (inp, hid), jnp.float32)
    se_b2 = 0.1 * jax.random.normal(ks[3], (inp, 1), jnp.float32)
    # depthwise weight (C, K*K); pointwise weight (Co, C) (== PyTorch layout)
    dw_w = 0.1 * jax.random.normal(ks[4], (inp, kernel_size * kernel_size), jnp.float32)
    pw_w = 0.1 * jax.random.normal(ks[5], (oup, inp), jnp.float32)

    # BatchNorm2d (inference): fold (gamma, beta, running_mean, running_var)
    bn1_g = 1.0 + 0.1 * jax.random.normal(ks[6], (inp, 1), jnp.float32)
    bn1_beta = 0.1 * jax.random.normal(ks[7], (inp, 1), jnp.float32)
    bn1_m = jnp.zeros((inp, 1), jnp.float32)
    bn1_v = jnp.ones((inp, 1), jnp.float32)
    bn2_g = 1.0 + 0.1 * jax.random.normal(ks[8], (oup, 1), jnp.float32)
    bn2_beta = 0.1 * jax.random.normal(ks[9], (oup, 1), jnp.float32)
    bn2_m = jnp.zeros((oup, 1), jnp.float32)
    bn2_v = jnp.ones((oup, 1), jnp.float32)

    bn1_s = bn1_g / jnp.sqrt(bn1_v + eps)
    bn1_b = bn1_beta - bn1_m * bn1_s
    bn2_s = bn2_g / jnp.sqrt(bn2_v + eps)
    bn2_b = bn2_beta - bn2_m * bn2_s
    return dict(se_w1=se_w1, se_b1=se_b1, se_w2t=se_w2t, se_b2=se_b2,
                dw_w=dw_w, pw_w=pw_w,
                bn1_s=bn1_s, bn1_b=bn1_b, bn2_s=bn2_s, bn2_b=bn2_b)


def lc_reference(x_nchw, params, kernel_size, stride):
    """Pure-JAX reference with identical math (for correctness check). NCHW."""
    x = x_nchw.astype(jnp.float32)
    B, C, H, W = x.shape
    K, S = kernel_size, stride
    P = (K - 1) // 2
    pooled = jnp.mean(x, axis=(2, 3))                                # (B, C)
    h = jnp.maximum(pooled @ params["se_w1"] + params["se_b1"], 0.0)
    g = h @ params["se_w2t"].T + params["se_b2"][:, 0][None, :]
    gate = jnp.clip(g + 3.0, 0.0, 6.0) / 6.0
    xs = x * gate[:, :, None, None]
    xp = jnp.pad(xs, ((0, 0), (0, 0), (P, P), (P, P)))
    Ho = (H + 2 * P - K) // S + 1
    Wo = (W + 2 * P - K) // S + 1
    acc = jnp.zeros((B, C, Ho, Wo), jnp.float32)
    for kh in range(K):
        for kw in range(K):
            patch = xp[:, :, kh:kh + (Ho - 1) * S + 1:S, kw:kw + (Wo - 1) * S + 1:S]
            acc = acc + patch * params["dw_w"][:, kh * K + kw][None, :, None, None]
    y = acc * params["bn1_s"][:, 0][None, :, None, None] + params["bn1_b"][:, 0][None, :, None, None]
    y = y * (jnp.clip(y + 3.0, 0.0, 6.0) / 6.0)
    z = jnp.einsum("bchw,oc->bohw", y, params["pw_w"])
    z = z * params["bn2_s"][:, 0][None, :, None, None] + params["bn2_b"][:, 0][None, :, None, None]
    z = z * (jnp.clip(z + 3.0, 0.0, 6.0) / 6.0)
    return z


if __name__ == "__main__":
    # LCModule(inp=4, oup=8, kernel_size=3, stride=1, use_se=True)
    inp, oup, K, S = 4, 8, 3, 1
    B, H, W = 2, 16, 16

    key = jax.random.PRNGKey(0)
    kx, kp = jax.random.split(key)
    x = jax.random.normal(kx, (B, inp, H, W), jnp.float32)           # NCHW input
    params = init_params(kp, inp, oup, K)

    out = lc_module_forward(x, params, K, S)
    out = jax.block_until_ready(out)
    assert out.shape == (B, oup, H // S, W // S), out.shape

    ref = lc_reference(x, params, K, S)
    max_diff = float(jnp.max(jnp.abs(out - ref)))
    if not jnp.allclose(out, ref, atol=1e-4, rtol=1e-4):
        raise AssertionError(f"Pallas output mismatch vs reference: max|diff|={max_diff}")

    print("KERNEL_OK")
</pallas_src>

<mosaic_0001>
module attributes {stable_mosaic.version = 11 : i64} {
  func.func @_lc_kernel(%arg0: i32, %arg1: memref<8x256xf32, #tpu.memory_space<vmem>>, %arg2: memref<9x8x256xf32, #tpu.memory_space<vmem>>, %arg3: memref<8x16xf32, #tpu.memory_space<vmem>>, %arg4: memref<1x16xf32, #tpu.memory_space<vmem>>, %arg5: memref<8x16xf32, #tpu.memory_space<vmem>>, %arg6: memref<8x1xf32, #tpu.memory_space<vmem>>, %arg7: memref<8x9xf32, #tpu.memory_space<vmem>>, %arg8: memref<8x1xf32, #tpu.memory_space<vmem>>, %arg9: memref<16x8xf32, #tpu.memory_space<vmem>>, %arg10: memref<16x1xf32, #tpu.memory_space<vmem>>, %arg11: memref<16x1xf32, #tpu.memory_space<vmem>>, %arg12: memref<16x256xf32, #tpu.memory_space<vmem>>) attributes {dimension_semantics = [#tpu.dimension_semantics<parallel>], iteration_bounds = array<i64: 1>, scalar_prefetch = 0 : i64, scratch_operands = 0 : i64, tpu.core_type = #tpu.core_type<tc>, window_params = [{transform_indices = @transform_0, window_bounds = array<i64: 8, 256>}, {pipeline_mode = #tpu.pipeline_mode<synchronous>, transform_indices = @transform_1, window_bounds = array<i64: 9, 8, 256>}, {pipeline_mode = #tpu.pipeline_mode<synchronous>, transform_indices = @transform_2, window_bounds = array<i64: 8, 16>}, {pipeline_mode = #tpu.pipeline_mode<synchronous>, transform_indices = @transform_3, window_bounds = array<i64: 1, 16>}, {pipeline_mode = #tpu.pipeline_mode<synchronous>, transform_indices = @transform_4, window_bounds = array<i64: 8, 16>}, {pipeline_mode = #tpu.pipeline_mode<synchronous>, transform_indices = @transform_5, window_bounds = array<i64: 8, 1>}, {pipeline_mode = #tpu.pipeline_mode<synchronous>, transform_indices = @transform_6, window_bounds = array<i64: 8, 9>}, {pipeline_mode = #tpu.pipeline_mode<synchronous>, transform_indices = @transform_7, window_bounds = array<i64: 8, 1>}, {pipeline_mode = #tpu.pipeline_mode<synchronous>, transform_indices = @transform_8, window_bounds = array<i64: 16, 8>}, {pipeline_mode = #tpu.pipeline_mode<synchronous>, transform_indices = @transform_9, window_bounds = array<i64: 16, 1>}, {pipeline_mode = #tpu.pipeline_mode<synchronous>, transform_indices = @transform_10, window_bounds = array<i64: 16, 1>}, {transform_indices = @transform_11, window_bounds = array<i64: 16, 256>}]} {
    %c0 = arith.constant 0 : index
    %c0_0 = arith.constant 0 : index
    %0 = vector.load %arg1[%c0, %c0_0] : memref<8x256xf32, #tpu.memory_space<vmem>>, vector<8x256xf32>
    %cst = arith.constant dense<0.000000e+00> : vector<8xf32>
    %1 = vector.multi_reduction <add>, %0, %cst [1] : vector<8x256xf32> to vector<8xf32>
    %2 = vector.shape_cast %1 : vector<8xf32> to vector<8x1xf32>
    %cst_1 = arith.constant 3.906250e-03 : f32
    %3 = vector.broadcast %cst_1 : f32 to vector<8x1xf32>
    %4 = arith.mulf %2, %3 : vector<8x1xf32>
    %c0_2 = arith.constant 0 : index
    %c0_3 = arith.constant 0 : index
    %5 = vector.load %arg3[%c0_2, %c0_3] : memref<8x16xf32, #tpu.memory_space<vmem>>, vector<8x16xf32>
    %6 = vector.broadcast %4 : vector<8x1xf32> to vector<8x16xf32>
    %7 = arith.mulf %5, %6 : vector<8x16xf32>
    %cst_4 = arith.constant dense<0.000000e+00> : vector<16xf32>
    %8 = vector.multi_reduction <add>, %7, %cst_4 [0] : vector<8x16xf32> to vector<16xf32>
    %9 = vector.shape_cast %8 : vector<16xf32> to vector<1x16xf32>
    %c0_5 = arith.constant 0 : index
    %c0_6 = arith.constant 0 : index
    %10 = vector.load %arg4[%c0_5, %c0_6] : memref<1x16xf32, #tpu.memory_space<vmem>>, vector<1x16xf32>
    %11 = arith.addf %9, %10 : vector<1x16xf32>
    %cst_7 = arith.constant 0.000000e+00 : f32
    %12 = vector.broadcast %cst_7 : f32 to vector<1x16xf32>
    %13 = arith.maximumf %11, %12 : vector<1x16xf32>
    %c0_8 = arith.constant 0 : index
    %c0_9 = arith.constant 0 : index
    %14 = vector.load %arg5[%c0_8, %c0_9] : memref<8x16xf32, #tpu.memory_space<vmem>>, vector<8x16xf32>
    %15 = vector.broadcast %13 : vector<1x16xf32> to vector<8x16xf32>
    %16 = arith.mulf %14, %15 : vector<8x16xf32>
    %cst_10 = arith.constant dense<0.000000e+00> : vector<8xf32>
    %17 = vector.multi_reduction <add>, %16, %cst_10 [1] : vector<8x16xf32> to vector<8xf32>
    %18 = vector.shape_cast %17 : vector<8xf32> to vector<8x1xf32>
    %c0_11 = arith.constant 0 : index
    %c0_12 = arith.constant 0 : index
    %19 = vector.load %arg6[%c0_11, %c0_12] : memref<8x1xf32, #tpu.memory_space<vmem>>, vector<8x1xf32>
    %20 = arith.addf %18, %19 : vector<8x1xf32>
    %cst_13 = arith.constant 3.000000e+00 : f32
    %21 = vector.broadcast %cst_13 : f32 to vector<8x1xf32>
    %22 = arith.addf %20, %21 : vector<8x1xf32>
    %cst_14 = arith.constant 0.000000e+00 : f32
    %cst_15 = arith.constant 6.000000e+00 : f32
    %23 = vector.broadcast %cst_14 : f32 to vector<8x1xf32>
    %24 = arith.maximumf %23, %22 : vector<8x1xf32>
    %25 = vector.broadcast %cst_15 : f32 to vector<8x1xf32>
    %26 = arith.minimumf %25, %24 : vector<8x1xf32>
    %cst_16 = arith.constant 0.166666672 : f32
    %27 = vector.broadcast %cst_16 : f32 to vector<8x1xf32>
    %28 = arith.mulf %26, %27 : vector<8x1xf32>
    %c0_17 = arith.constant 0 : index
    %c0_18 = arith.constant 0 : index
    %29 = vector.load %arg7[%c0_17, %c0_18] : memref<8x9xf32, #tpu.memory_space<vmem>>, vector<8x9xf32>
    %30 = vector.broadcast %28 : vector<8x1xf32> to vector<8x9xf32>
    %31 = arith.mulf %29, %30 : vector<8x9xf32>
    %cst_19 = arith.constant 0.000000e+00 : f32
    %32 = vector.broadcast %cst_19 : f32 to vector<8x256xf32>
    %c17_i32 = arith.constant 17 : i32
    %33 = tpu.dynamic_rotate %0 by %c17_i32 dim 1 : vector<8x256xf32>, i32 -> vector<8x256xf32>
    %c0_20 = arith.constant 0 : index
    %c0_21 = arith.constant 0 : index
    %c0_22 = arith.constant 0 : index
    %34 = vector.load %arg2[%c0_20, %c0_21, %c0_22] : memref<9x8x256xf32, #tpu.memory_space<vmem>>, vector<1x8x256xf32>
    %35 = vector.shape_cast %34 : vector<1x8x256xf32> to vector<8x256xf32>
    %36 = arith.mulf %33, %35 : vector<8x256xf32>
    %37 = vector.extract_strided_slice %31 {offsets = [0, 0], sizes = [8, 1], strides = [1, 1]} : vector<8x9xf32> to vector<8x1xf32>
    %38 = vector.broadcast %37 : vector<8x1xf32> to vector<8x256xf32>
    %39 = arith.mulf %36, %38 : vector<8x256xf32>
    %40 = arith.addf %32, %39 : vector<8x256xf32>
    %c16_i32 = arith.constant 16 : i32
    %41 = tpu.dynamic_rotate %0 by %c16_i32 dim 1 : vector<8x256xf32>, i32 -> vector<8x256xf32>
    %c1 = arith.constant 1 : index
    %c0_23 = arith.constant 0 : index
    %c0_24 = arith.constant 0 : index
    %42 = vector.load %arg2[%c1, %c0_23, %c0_24] : memref<9x8x256xf32, #tpu.memory_space<vmem>>, vector<1x8x256xf32>
    %43 = vector.shape_cast %42 : vector<1x8x256xf32> to vector<8x256xf32>
    %44 = arith.mulf %41, %43 : vector<8x256xf32>
    %45 = vector.extract_strided_slice %31 {offsets = [0, 1], sizes = [8, 1], strides = [1, 1]} : vector<8x9xf32> to vector<8x1xf32>
    %46 = vector.broadcast %45 : vector<8x1xf32> to vector<8x256xf32>
    %47 = arith.mulf %44, %46 : vector<8x256xf32>
    %48 = arith.addf %40, %47 : vector<8x256xf32>
    %c15_i32 = arith.constant 15 : i32
    %49 = tpu.dynamic_rotate %0 by %c15_i32 dim 1 : vector<8x256xf32>, i32 -> vector<8x256xf32>
    %c2 = arith.constant 2 : index
    %c0_25 = arith.constant 0 : index
    %c0_26 = arith.constant 0 : index
    %50 = vector.load %arg2[%c2, %c0_25, %c0_26] : memref<9x8x256xf32, #tpu.memory_space<vmem>>, vector<1x8x256xf32>
    %51 = vector.shape_cast %50 : vector<1x8x256xf32> to vector<8x256xf32>
    %52 = arith.mulf %49, %51 : vector<8x256xf32>
    %53 = vector.extract_strided_slice %31 {offsets = [0, 2], sizes = [8, 1], strides = [1, 1]} : vector<8x9xf32> to vector<8x1xf32>
    %54 = vector.broadcast %53 : vector<8x1xf32> to vector<8x256xf32>
    %55 = arith.mulf %52, %54 : vector<8x256xf32>
    %56 = arith.addf %48, %55 : vector<8x256xf32>
    %c1_i32 = arith.constant 1 : i32
    %57 = tpu.dynamic_rotate %0 by %c1_i32 dim 1 : vector<8x256xf32>, i32 -> vector<8x256xf32>
    %c3 = arith.constant 3 : index
    %c0_27 = arith.constant 0 : index
    %c0_28 = arith.constant 0 : index
    %58 = vector.load %arg2[%c3, %c0_27, %c0_28] : memref<9x8x256xf32, #tpu.memory_space<vmem>>, vector<1x8x256xf32>
    %59 = vector.shape_cast %58 : vector<1x8x256xf32> to vector<8x256xf32>
    %60 = arith.mulf %57, %59 : vector<8x256xf32>
    %61 = vector.extract_strided_slice %31 {offsets = [0, 3], sizes = [8, 1], strides = [1, 1]} : vector<8x9xf32> to vector<8x1xf32>
    %62 = vector.broadcast %61 : vector<8x1xf32> to vector<8x256xf32>
    %63 = arith.mulf %60, %62 : vector<8x256xf32>
    %64 = arith.addf %56, %63 : vector<8x256xf32>
    %65 = vector.extract_strided_slice %31 {offsets = [0, 4], sizes = [8, 1], strides = [1, 1]} : vector<8x9xf32> to vector<8x1xf32>
    %66 = vector.broadcast %65 : vector<8x1xf32> to vector<8x256xf32>
    %67 = arith.mulf %0, %66 : vector<8x256xf32>
    %68 = arith.addf %64, %67 : vector<8x256xf32>
    %c255_i32 = arith.constant 255 : i32
    %69 = tpu.dynamic_rotate %0 by %c255_i32 dim 1 : vector<8x256xf32>, i32 -> vector<8x256xf32>
    %c5 = arith.constant 5 : index
    %c0_29 = arith.constant 0 : index
    %c0_30 = arith.constant 0 : index
    %70 = vector.load %arg2[%c5, %c0_29, %c0_30] : memref<9x8x256xf32, #tpu.memory_space<vmem>>, vector<1x8x256xf32>
    %71 = vector.shape_cast %70 : vector<1x8x256xf32> to vector<8x256xf32>
    %72 = arith.mulf %69, %71 : vector<8x256xf32>
    %73 = vector.extract_strided_slice %31 {offsets = [0, 5], sizes = [8, 1], strides = [1, 1]} : vector<8x9xf32> to vector<8x1xf32>
    %74 = vector.broadcast %73 : vector<8x1xf32> to vector<8x256xf32>
    %75 = arith.mulf %72, %74 : vector<8x256xf32>
    %76 = arith.addf %68, %75 : vector<8x256xf32>
    %c241_i32 = arith.constant 241 : i32
    %77 = tpu.dynamic_rotate %0 by %c241_i32 dim 1 : vector<8x256xf32>, i32 -> vector<8x256xf32>
    %c6 = arith.constant 6 : index
    %c0_31 = arith.constant 0 : index
    %c0_32 = arith.constant 0 : index
    %78 = vector.load %arg2[%c6, %c0_31, %c0_32] : memref<9x8x256xf32, #tpu.memory_space<vmem>>, vector<1x8x256xf32>
    %79 = vector.shape_cast %78 : vector<1x8x256xf32> to vector<8x256xf32>
    %80 = arith.mulf %77, %79 : vector<8x256xf32>
    %81 = vector.extract_strided_slice %31 {offsets = [0, 6], sizes = [8, 1], strides = [1, 1]} : vector<8x9xf32> to vector<8x1xf32>
    %82 = vector.broadcast %81 : vector<8x1xf32> to vector<8x256xf32>
    %83 = arith.mulf %80, %82 : vector<8x256xf32>
    %84 = arith.addf %76, %83 : vector<8x256xf32>
    %c240_i32 = arith.constant 240 : i32
    %85 = tpu.dynamic_rotate %0 by %c240_i32 dim 1 : vector<8x256xf32>, i32 -> vector<8x256xf32>
    %c7 = arith.constant 7 : index
    %c0_33 = arith.constant 0 : index
    %c0_34 = arith.constant 0 : index
    %86 = vector.load %arg2[%c7, %c0_33, %c0_34] : memref<9x8x256xf32, #tpu.memory_space<vmem>>, vector<1x8x256xf32>
    %87 = vector.shape_cast %86 : vector<1x8x256xf32> to vector<8x256xf32>
    %88 = arith.mulf %85, %87 : vector<8x256xf32>
    %89 = vector.extract_strided_slice %31 {offsets = [0, 7], sizes = [8, 1], strides = [1, 1]} : vector<8x9xf32> to vector<8x1xf32>
    %90 = vector.broadcast %89 : vector<8x1xf32> to vector<8x256xf32>
    %91 = arith.mulf %88, %90 : vector<8x256xf32>
    %92 = arith.addf %84, %91 : vector<8x256xf32>
    %c239_i32 = arith.constant 239 : i32
    %93 = tpu.dynamic_rotate %0 by %c239_i32 dim 1 : vector<8x256xf32>, i32 -> vector<8x256xf32>
    %c8 = arith.constant 8 : index
    %c0_35 = arith.constant 0 : index
    %c0_36 = arith.constant 0 : index
    %94 = vector.load %arg2[%c8, %c0_35, %c0_36] : memref<9x8x256xf32, #tpu.memory_space<vmem>>, vector<1x8x256xf32>
    %95 = vector.shape_cast %94 : vector<1x8x256xf32> to vector<8x256xf32>
    %96 = arith.mulf %93, %95 : vector<8x256xf32>
    %97 = vector.extract_strided_slice %31 {offsets = [0, 8], sizes = [8, 1], strides = [1, 1]} : vector<8x9xf32> to vector<8x1xf32>
    %98 = vector.broadcast %97 : vector<8x1xf32> to vector<8x256xf32>
    %99 = arith.mulf %96, %98 : vector<8x256xf32>
    %100 = arith.addf %92, %99 : vector<8x256xf32>
    %c0_37 = arith.constant 0 : index
    %c0_38 = arith.constant 0 : index
    %101 = vector.load %arg8[%c0_37, %c0_38] : memref<8x1xf32, #tpu.memory_space<vmem>>, vector<8x1xf32>
    %102 = vector.broadcast %101 : vector<8x1xf32> to vector<8x256xf32>
    %103 = arith.addf %100, %102 : vector<8x256xf32>
    %cst_39 = arith.constant 3.000000e+00 : f32
    %104 = vector.broadcast %cst_39 : f32 to vector<8x256xf32>
    %105 = arith.addf %103, %104 : vector<8x256xf32>
    %cst_40 = arith.constant 0.000000e+00 : f32
    %cst_41 = arith.constant 6.000000e+00 : f32
    %106 = vector.broadcast %cst_40 : f32 to vector<8x256xf32>
    %107 = arith.maximumf %106, %105 : vector<8x256xf32>
    %108 = vector.broadcast %cst_41 : f32 to vector<8x256xf32>
    %109 = arith.minimumf %108, %107 : vector<8x256xf32>
    %cst_42 = arith.constant 0.166666672 : f32
    %110 = vector.broadcast %cst_42 : f32 to vector<8x256xf32>
    %111 = arith.mulf %109, %110 : vector<8x256xf32>
    %112 = arith.mulf %103, %111 : vector<8x256xf32>
    %c0_43 = arith.constant 0 : index
    %c0_44 = arith.constant 0 : index
    %113 = vector.load %arg9[%c0_43, %c0_44] : memref<16x8xf32, #tpu.memory_space<vmem>>, vector<16x8xf32>
    %cst_45 = arith.constant dense<0.000000e+00> : vector<16x256xf32>
    %114 = tpu.matmul %113, %112, %cst_45 {dimension_numbers = #tpu.dot_dimension_numbers<[1], [0], [0], [1], [0, 0, 1, 1], [], []>} : vector<16x8xf32>, vector<8x256xf32>, vector<16x256xf32> -> vector<16x256xf32>
    %c0_46 = arith.constant 0 : index
    %c0_47 = arith.constant 0 : index
    %115 = vector.load %arg10[%c0_46, %c0_47] : memref<16x1xf32, #tpu.memory_space<vmem>>, vector<16x1xf32>
    %116 = vector.broadcast %115 : vector<16x1xf32> to vector<16x256xf32>
    %117 = arith.mulf %114, %116 : vector<16x256xf32>
    %c0_48 = arith.constant 0 : index
    %c0_49 = arith.constant 0 : index
    %118 = vector.load %arg11[%c0_48, %c0_49] : memref<16x1xf32, #tpu.memory_space<vmem>>, vector<16x1xf32>
    %119 = vector.broadcast %118 : vector<16x1xf32> to vector<16x256xf32>
    %120 = arith.addf %117, %119 : vector<16x256xf32>
    %cst_50 = arith.constant 3.000000e+00 : f32
    %121 = vector.broadcast %cst_50 : f32 to vector<16x256xf32>
    %122 = arith.addf %120, %121 : vector<16x256xf32>
    %cst_51 = arith.constant 0.000000e+00 : f32
    %cst_52 = arith.constant 6.000000e+00 : f32
    %123 = vector.broadcast %cst_51 : f32 to vector<16x256xf32>
    %124 = arith.maximumf %123, %122 : vector<16x256xf32>
    %125 = vector.broadcast %cst_52 : f32 to vector<16x256xf32>
    %126 = arith.minimumf %125, %124 : vector<16x256xf32>
    %cst_53 = arith.constant 0.166666672 : f32
    %127 = vector.broadcast %cst_53 : f32 to vector<16x256xf32>
    %128 = arith.mulf %126, %127 : vector<16x256xf32>
    %129 = arith.mulf %120, %128 : vector<16x256xf32>
    %c0_54 = arith.constant 0 : index
    %c0_55 = arith.constant 0 : index
    %130 = vector.load %arg12[%c0_54, %c0_55] : memref<16x256xf32, #tpu.memory_space<vmem>>, vector<16x256xf32>
    tpu.vector_store %arg12[%c0_54, %c0_55], %129 {strides = array<i32>} : memref<16x256xf32, #tpu.memory_space<vmem>>, vector<16x256xf32>,
    return
  }
  func.func @transform_0(%arg0: i32) -> (i32, i32) {
    %c0_i32 = arith.constant 0 : i32
    %c0_i32_0 = arith.constant 0 : i32
    return %arg0, %c0_i32 : i32, i32
  }
  func.func @transform_1(%arg0: i32) -> (i32, i32, i32) {
    %c0_i32 = arith.constant 0 : i32
    %c0_i32_0 = arith.constant 0 : i32
    %c0_i32_1 = arith.constant 0 : i32
    %c0_i32_2 = arith.constant 0 : i32
    return %c0_i32, %c0_i32_0, %c0_i32_1 : i32, i32, i32
  }
  func.func @transform_2(%arg0: i32) -> (i32, i32) {
    %c0_i32 = arith.constant 0 : i32
    %c0_i32_0 = arith.constant 0 : i32
    %c0_i32_1 = arith.constant 0 : i32
    return %c0_i32, %c0_i32_0 : i32, i32
  }
  func.func @transform_3(%arg0: i32) -> (i32, i32) {
    %c0_i32 = arith.constant 0 : i32
    %c0_i32_0 = arith.constant 0 : i32
    %c0_i32_1 = arith.constant 0 : i32
    return %c0_i32, %c0_i32_0 : i32, i32
  }
  func.func @transform_4(%arg0: i32) -> (i32, i32) {
    %c0_i32 = arith.constant 0 : i32
    %c0_i32_0 = arith.constant 0 : i32
    %c0_i32_1 = arith.constant 0 : i32
    return %c0_i32, %c0_i32_0 : i32, i32
  }
  func.func @transform_5(%arg0: i32) -> (i32, i32) {
    %c0_i32 = arith.constant 0 : i32
    %c0_i32_0 = arith.constant 0 : i32
    %c0_i32_1 = arith.constant 0 : i32
    return %c0_i32, %c0_i32_0 : i32, i32
  }
  func.func @transform_6(%arg0: i32) -> (i32, i32) {
    %c0_i32 = arith.constant 0 : i32
    %c0_i32_0 = arith.constant 0 : i32
    %c0_i32_1 = arith.constant 0 : i32
    return %c0_i32, %c0_i32_0 : i32, i32
  }
  func.func @transform_7(%arg0: i32) -> (i32, i32) {
    %c0_i32 = arith.constant 0 : i32
    %c0_i32_0 = arith.constant 0 : i32
    %c0_i32_1 = arith.constant 0 : i32
    return %c0_i32, %c0_i32_0 : i32, i32
  }
  func.func @transform_8(%arg0: i32) -> (i32, i32) {
    %c0_i32 = arith.constant 0 : i32
    %c0_i32_0 = arith.constant 0 : i32
    %c0_i32_1 = arith.constant 0 : i32
    return %c0_i32, %c0_i32_0 : i32, i32
  }
  func.func @transform_9(%arg0: i32) -> (i32, i32) {
    %c0_i32 = arith.constant 0 : i32
    %c0_i32_0 = arith.constant 0 : i32
    %c0_i32_1 = arith.constant 0 : i32
    return %c0_i32, %c0_i32_0 : i32, i32
  }
  func.func @transform_10(%arg0: i32) -> (i32, i32) {
    %c0_i32 = arith.constant 0 : i32
    %c0_i32_0 = arith.constant 0 : i32
    %c0_i32_1 = arith.constant 0 : i32
    return %c0_i32, %c0_i32_0 : i32, i32
  }
  func.func @transform_11(%arg0: i32) -> (i32, i32) {
    %c0_i32 = arith.constant 0 : i32
    %c0_i32_0 = arith.constant 0 : i32
    return %arg0, %c0_i32 : i32, i32
  }
}

</mosaic_0001>

<llo_original>
// kernel: tpu_custom_call.1
$region0: #{tpu_custom_call.1}
  #allocation0 [shape = 'u32[]', space=smem, size = 0x4, offset = 0x4, fixed_abs, tag = 'smem constant byte address 0x4 - core index']
  #allocation1 [shape = 'u32[144,128]{1,0:T(1,128)}', space=vmem, size = 0x12000, scoped, tag = 'internal scratch']
  %s0 = inlined_call_operand.vmem [shape: f32[8,256], index: 0, kind: input, shape index: {}]
  %s1 = inlined_call_operand.hbm [shape: f32[9,8,256], index: 1, kind: input, shape index: {}]
  %s2 = inlined_call_operand.vmem [shape: f32[8,16], index: 2, kind: input, shape index: {}]
  %s3 = inlined_call_operand.vmem [shape: f32[1,16], index: 3, kind: input, shape index: {}]
  %s4 = inlined_call_operand.vmem [shape: f32[8,16], index: 4, kind: input, shape index: {}]
  %s5 = inlined_call_operand.vmem [shape: f32[8,1], index: 5, kind: input, shape index: {}]
  %s6 = inlined_call_operand.vmem [shape: f32[8,9], index: 6, kind: input, shape index: {}]
  %s7 = inlined_call_operand.vmem [shape: f32[8,1], index: 7, kind: input, shape index: {}]
  %s8 = inlined_call_operand.vmem [shape: f32[16,8], index: 8, kind: input, shape index: {}]
  %s9 = inlined_call_operand.vmem [shape: f32[16,1], index: 9, kind: input, shape index: {}]
  %s10 = inlined_call_operand.vmem [shape: f32[16,1], index: 10, kind: input, shape index: {}]
  %s11 = inlined_call_operand.hbm [shape: f32[16,256], index: 11, kind: output, shape index: {}]
  %s12 = sld [smem:[#allocation0]]
  $region58: #{tpu_custom_call.1} parent=0
    _
  %s14 = ssub.s32 1, %s12
  %s15 = scalar_select 0, %s14, %s12
  $region1: #{tpu_custom_call.1} parent=0
    #allocation2 [shape = 'u8[73728]{0}', space=vmem, size = 0x12000, scoped, tag = 'input window, operand 1, single buffered']
    #allocation3 [shape = 's32[1]{0}', space=sflag, size = 0x4, scoped, tag = 'scoped memory for tpu_custom_call.1']
    #allocation4 [shape = 's32[1]{0}', space=sflag, size = 0x4, scoped, tag = 'scoped memory for tpu_custom_call.1']
    #allocation5 [shape = 'u8[16384]{0}', space=vmem, size = 0x4000, scoped, tag = 'output window, operand 0, single buffered']
    %16 = vsyncpa [#allocation3], 0
    %17 = vsyncpa [#allocation4], 0
    // Predicated region
    $region2: #{tpu_custom_call.1} parent=1 // pred_check
      _
    $region3: #{tpu_custom_call.1} parent=1 // pred_check_branch
      %19 = sbr.rel (0) target = $region5
    $region4: #{tpu_custom_call.1} parent=1 // pred_region
      _
    $region5: #{tpu_custom_call.1} parent=1 // pred_fallthru
      _
    // Predicated region
    $region6: #{tpu_custom_call.1} parent=1 // pred_check
      _
    $region7: #{tpu_custom_call.1} parent=1 // pred_check_branch
      %21 = sbr.rel (0) target = $region9
    $region8: #{tpu_custom_call.1} parent=1 // pred_region
      %s23 = ssub.s32 2304, 2304
      %24 = vsyncadd [#allocation3], %s23
      %s25 = sshll.u32 [#allocation2], 4
      %s26 = int_to_ptr.vmem [resolvable:$true] %s25
      %31 = dma.hbm_to_vmem [thread:$0]  %s1, 2304, %s26, [#allocation3], 256, 256, 16
    $region9: #{tpu_custom_call.1} parent=1 // pred_fallthru
      _
    // Predicated region
    $region10: #{tpu_custom_call.1} parent=1 // pred_check
      _
    $region11: #{tpu_custom_call.1} parent=1 // pred_check_branch
      %33 = sbr.rel (0) target = $region13
    $region12: #{tpu_custom_call.1} parent=1 // pred_region
      _
    $region13: #{tpu_custom_call.1} parent=1 // pred_fallthru
      _
    // Predicated region
    $region14: #{tpu_custom_call.1} parent=1 // pred_check
      _
    $region15: #{tpu_custom_call.1} parent=1 // pred_check_branch
      %35 = sbr.rel (0) target = $region17
    $region16: #{tpu_custom_call.1} parent=1 // pred_region
      _
    $region17: #{tpu_custom_call.1} parent=1 // pred_fallthru
      _
    // Predicated region
    $region18: #{tpu_custom_call.1} parent=1 // pred_check
      _
    $region19: #{tpu_custom_call.1} parent=1 // pred_check_branch
      %37 = sbr.rel (0) target = $region21
    $region20: #{tpu_custom_call.1} parent=1 // pred_region
      _
    $region21: #{tpu_custom_call.1} parent=1 // pred_fallthru
      _
    // Predicated region
    $region22: #{tpu_custom_call.1} parent=1 // pred_check
      _
    $region23: #{tpu_custom_call.1} parent=1 // pred_check_branch
      %39 = sbr.rel (0) target = $region25
    $region24: #{tpu_custom_call.1} parent=1 // pred_region
      _
    $region25: #{tpu_custom_call.1} parent=1 // pred_fallthru
      _
    // Predicated region
    $region26: #{tpu_custom_call.1} parent=1 // pred_check
      _
    $region27: #{tpu_custom_call.1} parent=1 // pred_check_branch
      %41 = sbr.rel (0) target = $region29
    $region28: #{tpu_custom_call.1} parent=1 // pred_region
      _
    $region29: #{tpu_custom_call.1} parent=1 // pred_fallthru
      _
    // Predicated region
    $region30: #{tpu_custom_call.1} parent=1 // pred_check
      _
    $region31: #{tpu_custom_call.1} parent=1 // pred_check_branch
      %43 = sbr.rel (0) target = $region33
    $region32: #{tpu_custom_call.1} parent=1 // pred_region
      _
    $region33: #{tpu_custom_call.1} parent=1 // pred_fallthru
      _
    // Predicated region
    $region34: #{tpu_custom_call.1} parent=1 // pred_check
      _
    $region35: #{tpu_custom_call.1} parent=1 // pred_check_branch
      %45 = sbr.rel (0) target = $region37
    $region36: #{tpu_custom_call.1} parent=1 // pred_region
      _
    $region37: #{tpu_custom_call.1} parent=1 // pred_fallthru
      _
    // Predicated region
    $region38: #{tpu_custom_call.1} parent=1 // pred_check
      _
    $region39: #{tpu_custom_call.1} parent=1 // pred_check_branch
      %47 = sbr.rel (0) target = $region41
    $region40: #{tpu_custom_call.1} parent=1 // pred_region
      _
    $region41: #{tpu_custom_call.1} parent=1 // pred_fallthru
      _
    // Predicated region
    $region42: #{tpu_custom_call.1} parent=1 // pred_check
      _
    $region43: #{tpu_custom_call.1} parent=1 // pred_check_branch
      %49 = sbr.rel (0) target = $region45
    $region44: #{tpu_custom_call.1} parent=1 // pred_region
      _
    $region45: #{tpu_custom_call.1} parent=1 // pred_fallthru
      _
    // Predicated region
    $region46: #{tpu_custom_call.1} parent=1 // pred_check
      _
    $region47: #{tpu_custom_call.1} parent=1 // pred_check_branch
      %51 = sbr.rel (0) target = $region49
    $region48: #{tpu_custom_call.1} parent=1 // pred_region
      %52 = dma.done [#allocation3], 2304
    $region49: #{tpu_custom_call.1} parent=1 // pred_fallthru
      _
    %v53 = vld [vmem:[%s0] sm:$0xff]
    %v54 = vld [vmem:[%s0 + $0x8] sm:$0xff]
    %v55 = vadd.f32 %v53, %v54
    %56 = vadd.xlane.f32.xlu0 %v55
    %v57 = vpop.xlane.xlu0 %56
    %v58 = vmul.f32 %v57, 0.00390625
    %v59 = vld [vmem:[%s2] sm:$0xff]
    %v60 = vmul.f32 %v59, %v58
    %vm61 = vcmask 130048
    %v62 = vsel %vm61, %v60, 0.0
    %v63 = vrot.slane %v62, 4
    %v64 = vadd.f32 %v62, %v63
    %v65 = vrot.slane %v64, 2
    %v66 = vadd.f32 %v64, %v65
    %v67 = vrot.slane %v66, 1
    %v68 = vadd.f32 %v66, %v67
    %v69 = vld [vmem:[%s3] sm:$0x1]
    %v70 = vadd.f32 %v68, %v69
    %v71 = vmax.f32 %v70, 0.0
    %v72 = vld [vmem:[%s4] sm:$0xff]
    %v73 = vlaneseq
    %v74 = vshrl.u32 %v73, 7
    %v75 = vsub.s32 0, %v74
    %v76 = vrot.slane %v71, %v75
    %v77 = vmul.f32 %v72, %v76
    %v78 = vsel %vm61, %v77, 0.0
    %79 = vadd.xlane.f32.xlu0 %v78
    %v80 = vpop.xlane.xlu0 %79
    %v81 = vld [vmem:[%s5] sm:$0xff]
    %v82 = vadd.f32 %v80, %v81
    %v83 = vadd.f32 %v82, 3.0
    %v84 = vmax.f32 %v83, 0.0
    %v85 = vmin.f32 %v84, 6.0
    %v86 = vmul.f32 %v85, 0.16666667
    %v87 = vld [vmem:[%s6] sm:$0xff]
    %89 = vset.pattern.permute.xlu0 0
    %90 = vperm.xlu0 %89, %v86
    %v91 = vpop.permute.xlu0 %90
    %v93 = vmul.f32 %v87, %v91
    %94 = vrot.lane.b32.xlu0 %v53, 17
    %v95 = vpop.permute.xlu0 %94
    %96 = vrot.lane.b32.xlu0 %v54, 17
    %v97 = vpop.permute.xlu0 %96
    %v98 = vlaneseq
    %v99 = vand.u32 %v98, 127
    %vm100 = vcmp.lt.s32.totalorder %v99, 17
    %v101 = vsel %vm100, %v95, %v97
    %v102 = vsel %vm100, %v97, %v95
    %v103 = vld [vmem:[#allocation2] sm:$0xff]
    %v104 = vld [vmem:[#allocation2 + $0x8] sm:$0xff]
    %v105 = vmul.f32 %v102, %v103
    %v106 = vmul.f32 %v101, %v104
    %108 = vset.pattern.permute.xlu0 0
    %109 = vperm.xlu0 %108, %v93
    %v110 = vpop.permute.xlu0 %109
    %v112 = vmul.f32 %v105, %v110
    %v113 = vmul.f32 %v106, %v110
    %v114 = vadd.f32 %v112, 0.0
    %v115 = vadd.f32 %v113, 0.0
    %116 = vrot.lane.b32.xlu0 %v53, 16
    %v117 = vpop.permute.xlu0 %116
    %118 = vrot.lane.b32.xlu0 %v54, 16
    %v119 = vpop.permute.xlu0 %118
    %vm120 = vcmp.lt.s32.totalorder %v99, 16
    %v121 = vsel %vm120, %v117, %v119
    %v122 = vsel %vm120, %v119, %v117
    %s123 = scalar_lea.vmem [#allocation2], 16
    %v124 = vld [vmem:[%s123] sm:$0xff]
    %v125 = vld [vmem:[%s123 + $0x8] sm:$0xff]
    %v126 = vmul.f32 %v122, %v124
    %v127 = vmul.f32 %v121, %v125
    %128 = vset.pattern.permute.xlu0 1
    %129 = vperm.xlu0 %128, %v93
    %v130 = vpop.permute.xlu0 %129
    %v132 = vmul.f32 %v126, %v130
    %v133 = vmul.f32 %v127, %v130
    %v134 = vadd.f32 %v114, %v132
    %v135 = vadd.f32 %v115, %v133
    %136 = vrot.lane.b32.xlu0 %v53, 15
    %v137 = vpop.permute.xlu0 %136
    %138 = vrot.lane.b32.xlu0 %v54, 15
    %v139 = vpop.permute.xlu0 %138
    %vm140 = vcmp.lt.s32.totalorder %v99, 15
    %v141 = vsel %vm140, %v137, %v139
    %v142 = vsel %vm140, %v139, %v137
    %s143 = scalar_lea.vmem [#allocation2], 32
    %v144 = vld [vmem:[%s143] sm:$0xff]
    %v145 = vld [vmem:[%s143 + $0x8] sm:$0xff]
    %v146 = vmul.f32 %v142, %v144
    %v147 = vmul.f32 %v141, %v145
    %148 = vset.pattern.permute.xlu0 2
    %149 = vperm.xlu0 %148, %v93
    %v150 = vpop.permute.xlu0 %149
    %v152 = vmul.f32 %v146, %v150
    %v153 = vmul.f32 %v147, %v150
    %v154 = vadd.f32 %v134, %v152
    %v155 = vadd.f32 %v135, %v153
    %156 = vrot.lane.b32.xlu0 %v53, 1
    %v157 = vpop.permute.xlu0 %156
    %158 = vrot.lane.b32.xlu0 %v54, 1
    %v159 = vpop.permute.xlu0 %158
    %vm160 = vcmp.lt.s32.totalorder %v99, 1
    %v161 = vsel %vm160, %v157, %v159
    %v162 = vsel %vm160, %v159, %v157
    %s163 = scalar_lea.vmem [#allocation2], 48
    %v164 = vld [vmem:[%s163] sm:$0xff]
    %v165 = vld [vmem:[%s163 + $0x8] sm:$0xff]
    %v166 = vmul.f32 %v162, %v164
    %v167 = vmul.f32 %v161, %v165
    %168 = vset.pattern.permute.xlu0 3
    %169 = vperm.xlu0 %168, %v93
    %v170 = vpop.permute.xlu0 %169
    %v172 = vmul.f32 %v166, %v170
    %v173 = vmul.f32 %v167, %v170
    %v174 = vadd.f32 %v154, %v172
    %v175 = vadd.f32 %v155, %v173
    %176 = vset.pattern.permute.xlu0 4
    %177 = vperm.xlu0 %176, %v93
    %v178 = vpop.permute.xlu0 %177
    %v180 = vmul.f32 %v53, %v178
    %v181 = vmul.f32 %v54, %v178
    %v182 = vadd.f32 %v174, %v180
    %v183 = vadd.f32 %v175, %v181
    %184 = vrot.lane.b32.xlu0 %v53, 127
    %v185 = vpop.permute.xlu0 %184
    %186 = vrot.lane.b32.xlu0 %v54, 127
    %v187 = vpop.permute.xlu0 %186
    %vm188 = vcmp.lt.s32.totalorder %v99, 127
    %v189 = vsel %vm188, %v185, %v187
    %v190 = vsel %vm188, %v187, %v185
    %s191 = scalar_lea.vmem [#allocation2], 80
    %v192 = vld [vmem:[%s191] sm:$0xff]
    %v193 = vld [vmem:[%s191 + $0x8] sm:$0xff]
    %v194 = vmul.f32 %v189, %v192
    %v195 = vmul.f32 %v190, %v193
    %196 = vset.pattern.permute.xlu0 5
    %197 = vperm.xlu0 %196, %v93
    %v198 = vpop.permute.xlu0 %197
    %v200 = vmul.f32 %v194, %v198
    %v201 = vmul.f32 %v195, %v198
    %v202 = vadd.f32 %v182, %v200
    %v203 = vadd.f32 %v183, %v201
    %204 = vrot.lane.b32.xlu0 %v53, 113
    %v205 = vpop.permute.xlu0 %204
    %206 = vrot.lane.b32.xlu0 %v54, 113
    %v207 = vpop.permute.xlu0 %206
    %vm208 = vcmp.lt.s32.totalorder %v99, 113
    %v209 = vsel %vm208, %v205, %v207
    %v210 = vsel %vm208, %v207, %v205
    %s211 = scalar_lea.vmem [#allocation2], 96
    %v212 = vld [vmem:[%s211] sm:$0xff]
    %v213 = vld [vmem:[%s211 + $0x8] sm:$0xff]
    %v214 = vmul.f32 %v209, %v212
    %v215 = vmul.f32 %v210, %v213
    %216 = vset.pattern.permute.xlu0 6
    %217 = vperm.xlu0 %216, %v93
    %v218 = vpop.permute.xlu0 %217
    %v220 = vmul.f32 %v214, %v218
    %v221 = vmul.f32 %v215, %v218
    %v222 = vadd.f32 %v202, %v220
    %v223 = vadd.f32 %v203, %v221
    %224 = vrot.lane.b32.xlu0 %v53, 112
    %v225 = vpop.permute.xlu0 %224
    %226 = vrot.lane.b32.xlu0 %v54, 112
    %v227 = vpop.permute.xlu0 %226
    %vm228 = vcmp.lt.s32.totalorder %v99, 112
    %v229 = vsel %vm228, %v225, %v227
    %v230 = vsel %vm228, %v227, %v225
    %s231 = scalar_lea.vmem [#allocation2], 112
    %v232 = vld [vmem:[%s231] sm:$0xff]
    %v233 = vld [vmem:[%s231 + $0x8] sm:$0xff]
    %v234 = vmul.f32 %v229, %v232
    %v235 = vmul.f32 %v230, %v233
    %236 = vset.pattern.permute.xlu0 7
    %237 = vperm.xlu0 %236, %v93
    %v238 = vpop.permute.xlu0 %237
    %v240 = vmul.f32 %v234, %v238
    %v241 = vmul.f32 %v235, %v238
    %v242 = vadd.f32 %v222, %v240
    %v243 = vadd.f32 %v223, %v241
    %244 = vrot.lane.b32.xlu0 %v53, 111
    %v245 = vpop.permute.xlu0 %244
    %246 = vrot.lane.b32.xlu0 %v54, 111
    %v247 = vpop.permute.xlu0 %246
    %vm248 = vcmp.lt.s32.totalorder %v99, 111
    %v249 = vsel %vm248, %v245, %v247
    %v250 = vsel %vm248, %v247, %v245
    %s251 = scalar_lea.vmem [#allocation2], 128
    %v252 = vld [vmem:[%s251] sm:$0xff]
    %v253 = vld [vmem:[%s251 + $0x8] sm:$0xff]
    %v254 = vmul.f32 %v249, %v252
    %v255 = vmul.f32 %v250, %v253
    %256 = vset.pattern.permute.xlu0 8
    %257 = vperm.xlu0 %256, %v93
    %v258 = vpop.permute.xlu0 %257
    %v260 = vmul.f32 %v254, %v258
    %v261 = vmul.f32 %v255, %v258
    %v262 = vadd.f32 %v242, %v260
    %v263 = vadd.f32 %v243, %v261
    %v264 = vld [vmem:[%s7] sm:$0xff]
    %266 = vset.pattern.permute.xlu0 0
    %267 = vperm.xlu0 %266, %v264
    %v268 = vpop.permute.xlu0 %267
    %v270 = vadd.f32 %v262, %v268
    %v271 = vadd.f32 %v263, %v268
    %v272 = vadd.f32 %v270, 3.0
    %v273 = vadd.f32 %v271, 3.0
    %v274 = vmax.f32 %v272, 0.0
    %v275 = vmax.f32 %v273, 0.0
    %v276 = vmin.f32 %v274, 6.0
    %v277 = vmin.f32 %v275, 6.0
    %v278 = vmul.f32 %v276, 0.16666667
    %v279 = vmul.f32 %v277, 0.16666667
    %v280 = vmul.f32 %v270, %v278
    %v281 = vmul.f32 %v271, %v279
    %v282 = vld [vmem:[%s8] sm:$0xff]
    %v283 = vld [vmem:[%s8 + $0x8] sm:$0xff]
    %vm284 = vcmask 64512
    %v286 = vsel %vm284, %v282, 0
    %v289 = vsel %vm284, %v283, 0
    %291 = vmatprep.subr.mxu0 %v281
    %292 = vmatpush1.msra.mxu0 %v280
    %293 = vmatprep.subr.mxu0 0.0
    %294 = vmatpush1.msra.mxu0 0.0
    %295 = vmatprep.subr.mxu0 0.0
    %296 = vmatpush1.msra.mxu0 0.0
    %297 = vmatprep.subr.mxu0 0.0
    %298 = vmatpush1.msra.mxu0 0.0
    %299 = vmatprep.subr.mxu0 0.0
    %300 = vmatpush1.msra.mxu0 0.0
    %301 = vmatprep.subr.mxu0 0.0
    %302 = vmatpush1.msra.mxu0 0.0
    %303 = vmatprep.subr.mxu0 0.0
    %304 = vmatpush1.msra.mxu0 0.0
    %305 = vmatprep.subr.mxu0 0.0
    %306 = vmatpush1.msra.mxu0 0.0
    %307 = vmatprep.subr.mxu0 0.0
    %308 = vmatpush1.msra.mxu0 0.0
    %309 = vmatprep.subr.mxu0 0.0
    %310 = vmatpush1.msra.mxu0 0.0
    %311 = vmatprep.subr.mxu0 0.0
    %312 = vmatpush1.msra.mxu0 0.0
    %313 = vmatprep.subr.mxu0 0.0
    %314 = vmatpush1.msra.mxu0 0.0
    %315 = vmatprep.subr.mxu0 0.0
    %316 = vmatpush1.msra.mxu0 0.0
    %317 = vmatprep.subr.mxu0 0.0
    %318 = vmatpush1.msra.mxu0 0.0
    %319 = vmatprep.subr.mxu0 0.0
    %320 = vmatpush1.msra.mxu0 0.0
    %321 = vmatprep.subr.mxu0 0.0
    %322 = vmatpush1.msra.mxu0 0.0
    %323 = vmatprep.subr.mxu0 0.0
    %324 = vmatpush1.msra.mxu0 0.0
    %325 = vmatprep.subr.mxu0 0.0
    %326 = vmatpush1.msra.mxu0 0.0
    %327 = vmatprep.subr.mxu0 0.0
    %328 = vmatpush1.msra.mxu0 0.0
    %329 = vmatprep.subr.mxu0 0.0
    %330 = vmatpush1.msra.mxu0 0.0
    %331 = vmatprep.subr.mxu0 0.0
    %332 = vmatpush1.msra.mxu0 0.0
    %333 = vmatprep.subr.mxu0 0.0
    %334 = vmatpush1.msra.mxu0 0.0
    %335 = vmatprep.subr.mxu0 0.0
    %336 = vmatpush1.msra.mxu0 0.0
    %337 = vmatprep.subr.mxu0 0.0
    %338 = vmatpush1.msra.mxu0 0.0
    %339 = vmatprep.subr.mxu0 0.0
    %340 = vmatpush1.msra.mxu0 0.0
    %341 = vmatprep.subr.mxu0 0.0
    %342 = vmatpush1.msra.mxu0 0.0
    %343 = vmatprep.subr.mxu0 0.0
    %344 = vmatpush1.msra.mxu0 0.0
    %345 = vmatprep.subr.mxu0 0.0
    %346 = vmatpush1.msra.mxu0 0.0
    %347 = vmatprep.subr.mxu0 0.0
    %348 = vmatpush1.msra.mxu0 0.0
    %349 = vmatprep.subr.mxu0 0.0
    %350 = vmatpush1.msra.mxu0 0.0
    %351 = vmatprep.subr.mxu0 0.0
    %352 = vmatpush1.msra.mxu0 0.0
    %353 = vmatprep.subr.mxu0 0.0
    %354 = vmatpush1.msra.mxu0 0.0
    %355 = vmatprep.mubr.f32.mxu0 0.0
    %356 = vmatmul.mubr.f32.gmra.mrb[0].mxu0 %v286
    %v357 = vpop.f32.mrb[0].mxu0
    %v358 = vadd.f32 0.0, %v357
    %v359 = vpop.f32.mrb[0].mxu0
    %v360 = vadd.f32 0.0, %v359
    %361 = vmatprep.mubr.f32.mxu0 0.0
    %362 = vmatmul.mubr.f32.gmra.mrb[0].mxu0 %v289
    %v363 = vpop.f32.mrb[0].mxu0
    %v364 = vadd.f32 0.0, %v363
    %v365 = vpop.f32.mrb[0].mxu0
    %v366 = vadd.f32 0.0, %v365
    %367 = vdwg.mxu0
    %v368 = vld [vmem:[%s9] sm:$0xff]
    %v369 = vld [vmem:[%s9 + $0x8] sm:$0xff]
    %371 = vset.pattern.permute.xlu0 0
    %372 = vperm.xlu0 %371, %v368
    %v373 = vpop.permute.xlu0 %372
    %376 = vset.pattern.permute.xlu0 0
    %377 = vperm.xlu0 %376, %v369
    %v378 = vpop.permute.xlu0 %377
    %v380 = vmul.f32 %v358, %v373
    %v381 = vmul.f32 %v360, %v373
    %v382 = vmul.f32 %v364, %v378
    %v383 = vmul.f32 %v366, %v378
    %v384 = vld [vmem:[%s10] sm:$0xff]
    %v385 = vld [vmem:[%s10 + $0x8] sm:$0xff]
    %387 = vset.pattern.permute.xlu0 0
    %388 = vperm.xlu0 %387, %v384
    %v389 = vpop.permute.xlu0 %388
    %392 = vset.pattern.permute.xlu0 0
    %393 = vperm.xlu0 %392, %v385
    %v394 = vpop.permute.xlu0 %393
    %v396 = vadd.f32 %v380, %v389
    %v397 = vadd.f32 %v381, %v389
    %v398 = vadd.f32 %v382, %v394
    %v399 = vadd.f32 %v383, %v394
    %v400 = vadd.f32 %v396, 3.0
    %v401 = vadd.f32 %v397, 3.0
    %v402 = vadd.f32 %v398, 3.0
    %v403 = vadd.f32 %v399, 3.0
    %v404 = vmax.f32 %v400, 0.0
    %v405 = vmax.f32 %v401, 0.0
    %v406 = vmax.f32 %v402, 0.0
    %v407 = vmax.f32 %v403, 0.0
    %v408 = vmin.f32 %v404, 6.0
    %v409 = vmin.f32 %v405, 6.0
    %v410 = vmin.f32 %v406, 6.0
    %v411 = vmin.f32 %v407, 6.0
    %v412 = vmul.f32 %v408, 0.16666667
    %v413 = vmul.f32 %v409, 0.16666667
    %v414 = vmul.f32 %v410, 0.16666667
    %v415 = vmul.f32 %v411, 0.16666667
    %v416 = vmul.f32 %v396, %v412
    %v417 = vmul.f32 %v397, %v413
    %v418 = vmul.f32 %v398, %v414
    %v419 = vmul.f32 %v399, %v415
    %420 = vst [vmem:[#allocation5] sm:$0xff] %v416
    %421 = vst [vmem:[#allocation5 + $0x8] sm:$0xff] %v417
    %422 = vst [vmem:[#allocation5 + $0x10] sm:$0xff] %v418
    %423 = vst [vmem:[#allocation5 + $0x18] sm:$0xff] %v419
    // Predicated region
    $region50: #{tpu_custom_call.1} parent=1 // pred_check
      _
    $region51: #{tpu_custom_call.1} parent=1 // pred_check_branch
      %425 = sbr.rel (0) target = $region53
    $region52: #{tpu_custom_call.1} parent=1 // pred_region
      %s427 = ssub.s32 512, 512
      %428 = vsyncadd [#allocation4], %s427
      %s429 = sshll.u32 [#allocation5], 4
      %s430 = int_to_ptr.vmem [resolvable:$true] %s429
      %435 = dma.vmem_to_hbm [thread:$0]  %s430, 512, %s11, [#allocation4], 256, 256, 16
    $region53: #{tpu_custom_call.1} parent=1 // pred_fallthru
      _
    // Predicated region
    $region54: #{tpu_custom_call.1} parent=1 // pred_check
      _
    $region55: #{tpu_custom_call.1} parent=1 // pred_check_branch
      %437 = sbr.rel (0) target = $region57
    $region56: #{tpu_custom_call.1} parent=1 // pred_region
      %438 = dma.done [#allocation4], 512
    $region57: #{tpu_custom_call.1} parent=1 // pred_fallthru
      _
    %439 = vsyncpa [#allocation3], 1
    %440 = vsyncpa [#allocation4], 1

</llo_original>
